<compile_context>
chip_gen: v5e
topology: v5e:2x2
jax: 0.10.0
libtpu: 0.0.40
codegen_flags: <defaults>
</compile_context>

<pallas_src>
import jax
import jax.numpy as jnp
from jax.experimental import pallas as pl
from jax.experimental.pallas import tpu as pltpu

EPS = 1e-6


def _round_up(a, b):
    return (a + b - 1) // b * b


def _sublayer_connection_kernel(x_ref, w_ref, wb_ref, o_ref, normed_ref):
    """One (row-tile i, output-column-tile j) grid step.

    x_ref     : (tm, D)  native dtype   full rows (LN stats + residual need all of D)
    w_ref     : (D, tn)  bf16/f32       folded weight  diag(a2) @ W
    wb_ref    : (1, tn)  f32            folded bias    b2 @ W + b
    o_ref     : (tm, tn)                output block
    normed_ref: (tm, D)  bf16/f32       scratch: standardized rows, written at j == 0
    """
    d = x_ref.shape[-1]
    tn = o_ref.shape[-1]
    j = pl.program_id(1)

    # LayerNorm once per row tile; every j-step reuses the cached normalized rows.
    # (For a ragged last row tile the out-of-bounds rows hold unspecified data;
    #  any NaN/Inf they produce is discarded when the output block is clipped.)
    @pl.when(j == 0)
    def _():
        x = x_ref[...].astype(jnp.float32)
        mean = jnp.mean(x, axis=-1, keepdims=True)
        diff = x - mean
        var_unbiased = jnp.sum(diff * diff, axis=-1, keepdims=True) / (d - 1)
        normed_ref[...] = (diff * jax.lax.rsqrt(var_unbiased + EPS)).astype(
            normed_ref.dtype)

    # Representative sublayer: Linear(D, D) on the MXU, f32 accumulation.
    sub = jnp.dot(normed_ref[...], w_ref[...], preferred_element_type=jnp.float32)

    # TODO(synk): training-mode dropout (stateful PRNG mask) omitted; eval mode => identity.

    # Residual: matching column slice of the already-resident x block.
    if tn == d:
        x_res = x_ref[...]
    else:
        col0 = pl.multiple_of(j * tn, tn)
        x_res = x_ref[:, pl.ds(col0, tn)]

    o_ref[...] = (x_res.astype(jnp.float32) + sub + wb_ref[...]).astype(o_ref.dtype)


def sublayer_connection(x, a2, b2, w, wb, *, matmul_dtype=jnp.bfloat16,
                        tile_m=None, tile_n=None):
    """x: [B, S, D]. Returns x + Linear(LayerNorm(x))  (eval-mode dropout)."""
    B, S, D = x.shape
    M = B * S
    x2d = x.reshape(M, D)                      # native dtype: no host cast / pad

    # Fold the LayerNorm affine into the Linear (exact in f32):
    #   (a2 * n + b2) @ W + b  ==  n @ (diag(a2) @ W) + (b2 @ W + b)
    a2f = a2.astype(jnp.float32)
    b2f = b2.astype(jnp.float32)
    wf = w.astype(jnp.float32)
    w_folded = (a2f[:, None] * wf).astype(matmul_dtype)            # (D, D)
    wb_folded = (b2f @ wf + wb.astype(jnp.float32)).reshape(1, D)  # (1, D), f32

    x_isz = jnp.dtype(x.dtype).itemsize
    mm_isz = jnp.dtype(matmul_dtype).itemsize
    out_isz = x_isz

    # Per-generation VMEM budget: 75% of physical capacity (≈48 MiB on v7x,
    # ≈96 MiB on v5e/v6e), leaving headroom for compiler-managed temporaries.
    try:
        vmem_cap = int(pltpu.get_tpu_info().vmem_capacity_bytes)
    except Exception:  # interpret mode / query unavailable -> conservative 64 MiB
        vmem_cap = 64 << 20
    budget = vmem_cap * 3 // 4

    # --- output-column tile: keep the whole folded weight resident when it fits ---
    if tile_n is not None and D % tile_n == 0:
        tn = tile_n
    elif D % 128 != 0 or D * D * mm_isz <= budget // 3:
        tn = D
    elif D % 512 == 0:
        tn = 512
    elif D % 256 == 0:
        tn = 256
    else:
        tn = 128
    weight_resident = (tn == D)
    # Single-buffer the resident weight only when double-buffering would blow the budget.
    single_buf_weight = (weight_resident and hasattr(pl, "Buffered")
                         and 2 * D * D * mm_isz > budget // 3)
    w_nbuf = 1 if single_buf_weight else 2

    fixed_bytes = (w_nbuf * D * tn * mm_isz                      # weight buffer(s)
                   + 2 * 8 * max(_round_up(tn, 128), 128) * 4    # folded bias (padded)
                   + (1 << 20))                                  # misc slack

    # --- row tile: largest that fits, including the (tm, D)-sized kernel temporaries ---
    row_align = 16                             # safe for bf16 sublane packing
    per_row_bytes = (2 * D * x_isz             # x blocks (double-buffered, native dtype)
                     + D * mm_isz              # normed scratch (single buffer)
                     + 2 * tn * out_isz        # output blocks (double-buffered)
                     + 3 * D * 4               # f32 LN temporaries at j == 0
                     + 2 * tn * 4)             # f32 matmul accumulator + residual temp
    tm_cap = tile_m if tile_m is not None else 1024
    tm_budget = max(row_align, (budget - fixed_bytes) // per_row_bytes)
    tm = min(tm_cap, tm_budget, _round_up(M, row_align))
    tm = max(row_align, tm // row_align * row_align)
    # v7x megacore: keep >= 2 row tiles when M is large so both TensorCores get work.
    if M >= 512 and pl.cdiv(M, tm) < 2:
        tm = _round_up(pl.cdiv(M, 2), row_align)

    grid = (pl.cdiv(M, tm), D // tn)           # ragged last row tile handled by Pallas

    if weight_resident:
        w_index_map = lambda i, j: (0, 0)
    else:
        w_index_map = lambda i, j: (0, j)
    w_spec = None
    if single_buf_weight:
        try:
            w_spec = pl.BlockSpec((D, tn), w_index_map, pipeline_mode=pl.Buffered(1))
        except TypeError:
            w_spec = None
    if w_spec is None:
        w_spec = pl.BlockSpec((D, tn), w_index_map)

    est_vmem = fixed_bytes + tm * per_row_bytes
    vmem_limit = int(min(max(est_vmem + (6 << 20), 32 << 20), vmem_cap - (4 << 20)))

    cost = pl.CostEstimate(
        flops=2 * M * D * D,
        transcendentals=M,                     # one rsqrt per row
        bytes_accessed=(M * D * x_isz + M * D * out_isz
                        + (1 if weight_resident else grid[0]) * D * D * mm_isz),
    )

    out2d = pl.pallas_call(
        _sublayer_connection_kernel,
        out_shape=jax.ShapeDtypeStruct((M, D), x.dtype),
        grid_spec=pltpu.PrefetchScalarGridSpec(
            num_scalar_prefetch=0,
            grid=grid,
            in_specs=[
                pl.BlockSpec((tm, D), lambda i, j: (i, 0)),   # x rows (full D: LN + residual)
                w_spec,                                       # folded weight
                pl.BlockSpec((1, tn), lambda i, j: (0, j)),   # folded bias
            ],
            out_specs=pl.BlockSpec((tm, tn), lambda i, j: (i, j)),
            scratch_shapes=[pltpu.VMEM((tm, D), matmul_dtype)],  # normalized-rows cache
        ),
        compiler_params=pltpu.CompilerParams(
            dimension_semantics=("parallel", "arbitrary"),    # scratch carries across j
            vmem_limit_bytes=vmem_limit,
        ),
        cost_estimate=cost,
    )(x2d, w_folded, wb_folded)

    return out2d.reshape(B, S, D)


def reference_f32(x, a2, b2, w, wb):
    """Pure-f32 JAX mirror of the PyTorch forward (eval-mode dropout)."""
    xf = x.astype(jnp.float32)
    mean = jnp.mean(xf, axis=-1, keepdims=True)
    diff = xf - mean
    var_u = jnp.sum(diff * diff, axis=-1, keepdims=True) / (xf.shape[-1] - 1)
    normed = a2 * diff / jnp.sqrt(var_u + EPS) + b2
    return (xf + normed @ w + wb).astype(x.dtype)


if __name__ == "__main__":
    B, S, D = 2, 8, 32  # batch, seq, hidden (features == size == D)

    key = jax.random.PRNGKey(0)
    kx, ka, kb2, kw, kb, kx2 = jax.random.split(key, 6)

    x = jax.random.normal(kx, (B, S, D), dtype=jnp.float32)

    # LayerNorm params (module init is ones/zeros; perturb so affine folding is exercised).
    a2 = 1.0 + 0.1 * jax.random.normal(ka, (D,), dtype=jnp.float32)
    b2 = 0.1 * jax.random.normal(kb2, (D,), dtype=jnp.float32)

    # Deterministic synthetic sublayer (Linear D->D) parameters.
    w = jax.random.normal(kw, (D, D), dtype=jnp.float32) * 0.05
    wb = jax.random.normal(kb, (D,), dtype=jnp.float32) * 0.05

    ref = reference_f32(x, a2, b2, w, wb)

    # 1) f32 matmul path: faithful to the PyTorch math -> tight tolerance.
    out_f32 = jax.block_until_ready(
        sublayer_connection(x, a2, b2, w, wb, matmul_dtype=jnp.float32))
    assert out_f32.shape == (B, S, D)
    assert jnp.allclose(out_f32, ref, atol=1e-4, rtol=1e-4)

    # 2) default bf16-MXU path (f32 accumulation) -> bf16-level tolerance.
    out_bf16 = jax.block_until_ready(sublayer_connection(x, a2, b2, w, wb))
    assert out_bf16.shape == (B, S, D)
    assert jnp.allclose(out_bf16, ref, atol=3e-2, rtol=3e-2)

    # 3) ragged rows: B*S not a multiple of the row tile (cdiv grid, no host pad).
    x_odd = jax.random.normal(kx2, (B, 7, D), dtype=jnp.float32)
    out_odd = jax.block_until_ready(
        sublayer_connection(x_odd, a2, b2, w, wb, matmul_dtype=jnp.float32))
    assert jnp.allclose(out_odd, reference_f32(x_odd, a2, b2, w, wb),
                        atol=1e-4, rtol=1e-4)

    print("KERNEL_OK")
</pallas_src>

<mosaic_0001>
module attributes {stable_mosaic.version = 11 : i64} {
  func.func @_sublayer_connection_kernel(%arg0: i32, %arg1: i32, %arg2: memref<16x32xf32, #tpu.memory_space<vmem>>, %arg3: memref<32x32xf32, #tpu.memory_space<vmem>>, %arg4: memref<1x32xf32, #tpu.memory_space<vmem>>, %arg5: memref<16x32xf32, #tpu.memory_space<vmem>>, %arg6: memref<16x32xf32, #tpu.memory_space<vmem>>) attributes {dimension_semantics = [#tpu.dimension_semantics<parallel>, #tpu.dimension_semantics<arbitrary>], iteration_bounds = array<i64: 1, 1>, scalar_prefetch = 0 : i64, scratch_operands = 1 : i64, tpu.core_type = #tpu.core_type<tc>, window_params = [{transform_indices = @transform_0, window_bounds = array<i64: 16, 32>}, {pipeline_mode = #tpu.pipeline_mode<synchronous>, transform_indices = @transform_1, window_bounds = array<i64: 32, 32>}, {transform_indices = @transform_2, window_bounds = array<i64: 1, 32>}, {transform_indices = @transform_3, window_bounds = array<i64: 16, 32>}]} {
    %c0_i32 = arith.constant 0 : i32
    %0 = arith.cmpi eq, %arg1, %c0_i32 : i32
    %1 = arith.extui %0 : i1 to i32
    %c0_i32_0 = arith.constant 0 : i32
    %2 = arith.cmpi ne, %1, %c0_i32_0 : i32
    scf.if %2 {
      %c0_10 = arith.constant 0 : index
      %c0_11 = arith.constant 0 : index
      %12 = vector.load %arg2[%c0_10, %c0_11] : memref<16x32xf32, #tpu.memory_space<vmem>>, vector<16x32xf32>
      %cst_12 = arith.constant dense<0.000000e+00> : vector<16xf32>
      %13 = vector.multi_reduction <add>, %12, %cst_12 [1] : vector<16x32xf32> to vector<16xf32>
      %14 = vector.shape_cast %13 : vector<16xf32> to vector<16x1xf32>
      %cst_13 = arith.constant 3.200000e+01 : f32
      %15 = vector.broadcast %cst_13 : f32 to vector<16x1xf32>
      %16 = arith.divf %14, %15 : vector<16x1xf32>
      %17 = vector.broadcast %16 : vector<16x1xf32> to vector<16x32xf32>
      %18 = arith.subf %12, %17 : vector<16x32xf32>
      %19 = arith.mulf %18, %18 : vector<16x32xf32>
      %cst_14 = arith.constant dense<0.000000e+00> : vector<16xf32>
      %20 = vector.multi_reduction <add>, %19, %cst_14 [1] : vector<16x32xf32> to vector<16xf32>
      %21 = vector.shape_cast %20 : vector<16xf32> to vector<16x1xf32>
      %cst_15 = arith.constant 3.100000e+01 : f32
      %22 = vector.broadcast %cst_15 : f32 to vector<16x1xf32>
      %23 = arith.divf %21, %22 : vector<16x1xf32>
      %cst_16 = arith.constant 9.99999997E-7 : f32
      %24 = vector.broadcast %cst_16 : f32 to vector<16x1xf32>
      %25 = arith.addf %23, %24 : vector<16x1xf32>
      %26 = math.rsqrt %25 : vector<16x1xf32>
      %27 = vector.broadcast %26 : vector<16x1xf32> to vector<16x32xf32>
      %28 = arith.mulf %18, %27 : vector<16x32xf32>
      %c0_17 = arith.constant 0 : index
      %c0_18 = arith.constant 0 : index
      %29 = vector.load %arg6[%c0_17, %c0_18] : memref<16x32xf32, #tpu.memory_space<vmem>>, vector<16x32xf32>
      tpu.vector_store %arg6[%c0_17, %c0_18], %28 {strides = array<i32>} : memref<16x32xf32, #tpu.memory_space<vmem>>, vector<16x32xf32>,
    } else {
    }
    %c0 = arith.constant 0 : index
    %c0_1 = arith.constant 0 : index
    %3 = vector.load %arg6[%c0, %c0_1] : memref<16x32xf32, #tpu.memory_space<vmem>>, vector<16x32xf32>
    %c0_2 = arith.constant 0 : index
    %c0_3 = arith.constant 0 : index
    %4 = vector.load %arg3[%c0_2, %c0_3] : memref<32x32xf32, #tpu.memory_space<vmem>>, vector<32x32xf32>
    %cst = arith.constant dense<0.000000e+00> : vector<16x32xf32>
    %5 = tpu.matmul %3, %4, %cst {dimension_numbers = #tpu.dot_dimension_numbers<[1], [0], [0], [1], [0, 0, 1, 1], [], []>} : vector<16x32xf32>, vector<32x32xf32>, vector<16x32xf32> -> vector<16x32xf32>
    %c0_4 = arith.constant 0 : index
    %c0_5 = arith.constant 0 : index
    %6 = vector.load %arg2[%c0_4, %c0_5] : memref<16x32xf32, #tpu.memory_space<vmem>>, vector<16x32xf32>
    %7 = arith.addf %6, %5 : vector<16x32xf32>
    %c0_6 = arith.constant 0 : index
    %c0_7 = arith.constant 0 : index
    %8 = vector.load %arg4[%c0_6, %c0_7] : memref<1x32xf32, #tpu.memory_space<vmem>>, vector<1x32xf32>
    %9 = vector.broadcast %8 : vector<1x32xf32> to vector<16x32xf32>
    %10 = arith.addf %7, %9 : vector<16x32xf32>
    %c0_8 = arith.constant 0 : index
    %c0_9 = arith.constant 0 : index
    %11 = vector.load %arg5[%c0_8, %c0_9] : memref<16x32xf32, #tpu.memory_space<vmem>>, vector<16x32xf32>
    tpu.vector_store %arg5[%c0_8, %c0_9], %10 {strides = array<i32>} : memref<16x32xf32, #tpu.memory_space<vmem>>, vector<16x32xf32>,
    return
  }
  func.func @transform_0(%arg0: i32, %arg1: i32) -> (i32, i32) {
    %c0_i32 = arith.constant 0 : i32
    %c0_i32_0 = arith.constant 0 : i32
    return %arg0, %c0_i32 : i32, i32
  }
  func.func @transform_1(%arg0: i32, %arg1: i32) -> (i32, i32) {
    %c0_i32 = arith.constant 0 : i32
    %c0_i32_0 = arith.constant 0 : i32
    %c0_i32_1 = arith.constant 0 : i32
    return %c0_i32, %c0_i32_0 : i32, i32
  }
  func.func @transform_2(%arg0: i32, %arg1: i32) -> (i32, i32) {
    %c0_i32 = arith.constant 0 : i32
    %c0_i32_0 = arith.constant 0 : i32
    return %c0_i32, %arg1 : i32, i32
  }
  func.func @transform_3(%arg0: i32, %arg1: i32) -> (i32, i32) {
    %c0_i32 = arith.constant 0 : i32
    return %arg0, %arg1 : i32, i32
  }
}

</mosaic_0001>

<llo_original>
// kernel: tpu_custom_call.1
$region0: #{tpu_custom_call.1}
  #allocation0 [shape = 'u32[]', space=smem, size = 0x4, offset = 0x4, fixed_abs, tag = 'smem constant byte address 0x4 - core index']
  #allocation1 [shape = 'u32[72,128]{1,0:T(1,128)}', space=vmem, size = 0x9000, scoped, tag = 'internal scratch']
  #allocation2 [shape = 'f32[16,32]{1,0:T(8,128)}', space=vmem, size = 0x2000, scoped, tag = 'scratch operand']
  %s0 = inlined_call_operand.hbm [shape: f32[16,32], index: 0, kind: input, shape index: {}]
  %s1 = inlined_call_operand.hbm [shape: f32[32,32], index: 1, kind: input, shape index: {}]
  %s2 = inlined_call_operand.vmem [shape: f32[1,32], index: 2, kind: input, shape index: {}]
  %s3 = inlined_call_operand.hbm [shape: f32[16,32], index: 3, kind: output, shape index: {}]
  %s4 = sld [smem:[#allocation0]]
  $region34: #{tpu_custom_call.1} parent=0
    _
  %s6 = ssub.s32 1, %s4
  %s7 = scalar_select 0, %s6, %s4
  $region1: #{tpu_custom_call.1} parent=0
    #allocation3 [shape = 'u8[8192]{0}', space=vmem, size = 0x2000, scoped, tag = 'input window, operand 0, single buffered']
    #allocation4 [shape = 's32[1]{0}', space=sflag, size = 0x4, scoped, tag = 'scoped memory for tpu_custom_call.1']
    #allocation5 [shape = 's32[1]{0}', space=sflag, size = 0x4, scoped, tag = 'scoped memory for tpu_custom_call.1']
    #allocation6 [shape = 'u8[16384]{0}', space=vmem, size = 0x4000, scoped, tag = 'input window, operand 1, single buffered']
    #allocation7 [shape = 's32[1]{0}', space=sflag, size = 0x4, scoped, tag = 'scoped memory for tpu_custom_call.1']
    #allocation8 [shape = 'u8[8192]{0}', space=vmem, size = 0x2000, scoped, tag = 'output window, operand 0, single buffered']
    %8 = vsyncpa [#allocation4], 0
    %9 = vsyncpa [#allocation7], 0
    %10 = vsyncpa [#allocation5], 0
    // Predicated region
    $region2: #{tpu_custom_call.1} parent=1 // pred_check
      _
    $region3: #{tpu_custom_call.1} parent=1 // pred_check_branch
      %12 = sbr.rel (0) target = $region5
    $region4: #{tpu_custom_call.1} parent=1 // pred_region
      %14 = vsyncadd [#allocation4], 0
      %s15 = sshll.u32 %s0, 4
      %s16 = int_to_ptr.hbm [resolvable:$true] %s15
      %s17 = sshll.u32 [#allocation3], 4
      %s18 = int_to_ptr.vmem [resolvable:$true] %s17
      %23 = dma.hbm_to_vmem [thread:$0]  %s16, 256, %s18, [#allocation4], 128, 128, 8
    $region5: #{tpu_custom_call.1} parent=1 // pred_fallthru
      _
    // Predicated region
    $region6: #{tpu_custom_call.1} parent=1 // pred_check
      _
    $region7: #{tpu_custom_call.1} parent=1 // pred_check_branch
      %25 = sbr.rel (0) target = $region9
    $region8: #{tpu_custom_call.1} parent=1 // pred_region
      %27 = vsyncadd [#allocation7], 0
      %s28 = sshll.u32 %s1, 4
      %s29 = int_to_ptr.hbm [resolvable:$true] %s28
      %s30 = sshll.u32 [#allocation6], 4
      %s31 = int_to_ptr.vmem [resolvable:$true] %s30
      %36 = dma.hbm_to_vmem [thread:$0]  %s29, 512, %s31, [#allocation7], 128, 128, 8
    $region9: #{tpu_custom_call.1} parent=1 // pred_fallthru
      _
    // Predicated region
    $region10: #{tpu_custom_call.1} parent=1 // pred_check
      _
    $region11: #{tpu_custom_call.1} parent=1 // pred_check_branch
      %38 = sbr.rel (0) target = $region13
    $region12: #{tpu_custom_call.1} parent=1 // pred_region
      _
    $region13: #{tpu_custom_call.1} parent=1 // pred_fallthru
      _
    // Predicated region
    $region14: #{tpu_custom_call.1} parent=1 // pred_check
      _
    $region15: #{tpu_custom_call.1} parent=1 // pred_check_branch
      %40 = sbr.rel (0) target = $region17
    $region16: #{tpu_custom_call.1} parent=1 // pred_region
      %42 = dma.done [#allocation4], 256
    $region17: #{tpu_custom_call.1} parent=1 // pred_fallthru
      _
    // Predicated region
    $region18: #{tpu_custom_call.1} parent=1 // pred_check
      _
    $region19: #{tpu_custom_call.1} parent=1 // pred_check_branch
      %44 = sbr.rel (0) target = $region21
    $region20: #{tpu_custom_call.1} parent=1 // pred_region
      %46 = dma.done [#allocation7], 512
    $region21: #{tpu_custom_call.1} parent=1 // pred_fallthru
      _
    %p47 = scmp.eq.s32.totalorder 0, 0
    // Predicated region
    $region22: #{tpu_custom_call.1} parent=1 // pred_check
      %p48 = pneg %p47
    $region23: #{tpu_custom_call.1} parent=1 // pred_check_branch
      %50 = sbr.rel (%p48) target = $region25
    $region24: #{tpu_custom_call.1} parent=1 // pred_region
      %v51 = vld [vmem:[#allocation3] sm:$0xff]
      %v52 = vld [vmem:[#allocation3 + $0x8] sm:$0xff]
      %vm53 = vcmask 261120
      %v54 = vsel %vm53, %v51, 0.0
      %55 = vadd.xlane.f32.xlu0 %v54
      %v56 = vpop.xlane.xlu0 %55
      %v57 = vsel %vm53, %v52, 0.0
      %58 = vadd.xlane.f32.xlu0 %v57
      %v59 = vpop.xlane.xlu0 %58
      %v60 = vrcp.pop 32.0
      %v61 = vmul.f32 32.0, %v60
      %v62 = vsub.f32 1.0, %v61
      %v63 = vmul.f32 %v60, %v62
      %v64 = vadd.f32 %v60, %v63
      %vm65 = vweird.f32 %v60
      %v66 = vsel %vm65, %v60, %v64
      %v67 = vmul.f32 %v56, %v66
      %v68 = vmul.f32 %v59, %v66
      %v69 = vsub.f32 %v51, %v67
      %v70 = vsub.f32 %v52, %v68
      %v71 = vmul.f32 %v69, %v69
      %v72 = vmul.f32 %v70, %v70
      %v73 = vsel %vm53, %v71, 0.0
      %74 = vadd.xlane.f32.xlu0 %v73
      %v75 = vpop.xlane.xlu0 %74
      %v76 = vsel %vm53, %v72, 0.0
      %77 = vadd.xlane.f32.xlu0 %v76
      %v78 = vpop.xlane.xlu0 %77
      %v79 = vrcp.pop 31.0
      %v80 = vmul.f32 31.0, %v79
      %v81 = vsub.f32 1.0, %v80
      %v82 = vmul.f32 %v79, %v81
      %v83 = vadd.f32 %v79, %v82
      %vm84 = vweird.f32 %v79
      %v85 = vsel %vm84, %v79, %v83
      %v86 = vmul.f32 %v75, %v85
      %v87 = vmul.f32 %v78, %v85
      %v88 = vadd.f32 %v86, 1e-06
      %v89 = vadd.f32 %v87, 1e-06
      %v90 = vrsqrt.pop %v88
      %v91 = vmul.f32 %v90, %v88
      %v92 = vmul.f32 %v91, %v90
      %v93 = vmul.f32 0.5, %v92
      %v94 = vsub.f32 1.5, %v93
      %v95 = vmul.f32 %v90, %v94
      %vm96 = vweird.f32 %v88
      %vm97 = vweird.f32 %v90
      %vm98 = vmor %vm96, %vm97
      %v99 = vsel %vm98, %v90, %v95
      %v100 = vrsqrt.pop %v89
      %v101 = vmul.f32 %v100, %v89
      %v102 = vmul.f32 %v101, %v100
      %v103 = vmul.f32 0.5, %v102
      %v104 = vsub.f32 1.5, %v103
      %v105 = vmul.f32 %v100, %v104
      %vm106 = vweird.f32 %v89
      %vm107 = vweird.f32 %v100
      %vm108 = vmor %vm106, %vm107
      %v109 = vsel %vm108, %v100, %v105
      %v110 = vmul.f32 %v69, %v99
      %v111 = vmul.f32 %v70, %v109
      %112 = vst.msk [vmem:[#allocation2] sm:$0xff] %vm53, %v110
      %113 = vst.msk [vmem:[#allocation2 + $0x8] sm:$0xff] %vm53, %v111
    $region25: #{tpu_custom_call.1} parent=1 // pred_fallthru
      _
    %v114 = vld [vmem:[#allocation2] sm:$0xff]
    %v115 = vld [vmem:[#allocation2 + $0x8] sm:$0xff]
    %v116 = vld [vmem:[#allocation6] sm:$0xff]
    %v117 = vld [vmem:[#allocation6 + $0x8] sm:$0xff]
    %v118 = vld [vmem:[#allocation6 + $0x10] sm:$0xff]
    %v119 = vld [vmem:[#allocation6 + $0x18] sm:$0xff]
    %vm120 = vcmask 261120
    %v122 = vsel %vm120, %v114, 0
    %v125 = vsel %vm120, %v115, 0
    %127 = vmatpush.msra.mxu0 0.0
    %128 = vmatpush.msra.mxu0 0.0
    %129 = vmatpush.msra.mxu0 0.0
    %130 = vmatpush.msra.mxu0 0.0
    %131 = vmatpush.msra.mxu0 0.0
    %132 = vmatpush.msra.mxu0 0.0
    %133 = vmatpush.msra.mxu0 0.0
    %134 = vmatpush.msra.mxu0 0.0
    %135 = vmatpush.msra.mxu0 0.0
    %136 = vmatpush.msra.mxu0 0.0
    %137 = vmatpush.msra.mxu0 0.0
    %138 = vmatpush.msra.mxu0 0.0
    %139 = vmatpush.msra.mxu0 %v119
    %140 = vmatpush.msra.mxu0 %v118
    %141 = vmatpush.msra.mxu0 %v117
    %142 = vmatpush.msra.mxu0 %v116
    %143 = vmatmul.f32.gmra.mxu0 %v122
    %v144 = vpop.f32.mrf.mxu0
    %v145 = vadd.f32 0.0, %v144
    %146 = vmatmul.f32.gmra.mxu0 %v125
    %v147 = vpop.f32.mrf.mxu0
    %v148 = vadd.f32 0.0, %v147
    %149 = vdwg.mxu0
    %v150 = vld [vmem:[#allocation3] sm:$0xff]
    %v151 = vld [vmem:[#allocation3 + $0x8] sm:$0xff]
    %v152 = vadd.f32 %v150, %v145
    %v153 = vadd.f32 %v151, %v148
    %v154 = vld [vmem:[%s2] sm:$0x1]
    %v156 = vperm.slane %v154, 0
    %v158 = vadd.f32 %v152, %v156
    %v159 = vadd.f32 %v153, %v156
    %160 = vst.msk [vmem:[#allocation8] sm:$0xff] %vm120, %v158
    %161 = vst.msk [vmem:[#allocation8 + $0x8] sm:$0xff] %vm120, %v159
    // Predicated region
    $region26: #{tpu_custom_call.1} parent=1 // pred_check
      _
    $region27: #{tpu_custom_call.1} parent=1 // pred_check_branch
      %163 = sbr.rel (0) target = $region29
    $region28: #{tpu_custom_call.1} parent=1 // pred_region
      %165 = vsyncadd [#allocation5], 0
      %s166 = sshll.u32 [#allocation8], 4
      %s167 = int_to_ptr.vmem [resolvable:$true] %s166
      %s168 = sshll.u32 %s3, 4
      %s169 = int_to_ptr.hbm [resolvable:$true] %s168
      %174 = dma.vmem_to_hbm [thread:$0]  %s167, 256, %s169, [#allocation5], 128, 128, 8
    $region29: #{tpu_custom_call.1} parent=1 // pred_fallthru
      _
    // Predicated region
    $region30: #{tpu_custom_call.1} parent=1 // pred_check
      _
    $region31: #{tpu_custom_call.1} parent=1 // pred_check_branch
      %176 = sbr.rel (0) target = $region33
    $region32: #{tpu_custom_call.1} parent=1 // pred_region
      %178 = dma.done [#allocation5], 256
    $region33: #{tpu_custom_call.1} parent=1 // pred_fallthru
      _
    %179 = vsyncpa [#allocation4], 1
    %180 = vsyncpa [#allocation7], 1
    %181 = vsyncpa [#allocation5], 1

</llo_original>
